<compile_context>
chip_gen: v6e
topology: v6e:2x2x1
jax: 0.10.0
libtpu: 0.0.40
codegen_flags: <defaults>
</compile_context>

<pallas_src>
import jax
import jax.numpy as jnp
from jax.experimental import pallas as pl
from jax.experimental.pallas import tpu as pltpu

IN_FEATURES = 3
OUT_FEATURES = 3
LANE = 128          # padded feature width for the hidden layers (20 -> 128 lanes)
SUB = 8             # f32 sublane granularity for the batch axis
BIG_TILE_B = 2048   # max batch tile (fills the MXU M-dim; blocks are tiny after I/O narrowing)


# ----------------------------------------------------------------------------
# Kernel: fused 4-layer MLP on one batch tile. Weights/biases are VMEM-resident.
# ----------------------------------------------------------------------------
def mlp_kernel(x_ref, w_ref, b_ref, o_ref):
    x = x_ref[...]                                        # [tile_b, 3] f32

    # Layer 1 (in=3): VPU broadcast-FMA in f32 — a K=3 MXU matmul would be pure drain
    # latency.  Padded hidden lanes (cols 20..127) stay exactly 0 because the padded
    # weight columns and biases are 0.
    w0 = w_ref[0, 0:3, :].astype(jnp.float32)             # [3, 128]
    h = (x[:, 0:1] * w0[0:1, :]
         + x[:, 1:2] * w0[1:2, :]
         + x[:, 2:3] * w0[2:3, :]
         + b_ref[0])                                      # [tile_b, 128] f32
    h = jnp.maximum(h, 0.0)

    # Layers 2-3: bf16 operands on the MXU, f32 accumulation.
    h = jnp.dot(h.astype(jnp.bfloat16), w_ref[1],
                preferred_element_type=jnp.float32) + b_ref[1]
    h = jnp.maximum(h, 0.0)
    h = jnp.dot(h.astype(jnp.bfloat16), w_ref[2],
                preferred_element_type=jnp.float32) + b_ref[2]
    h = jnp.maximum(h, 0.0)

    # Layer 4: only the first 3 output lanes are real — store just those (3-lane masked
    # vst is negligible next to the HBM bytes saved by the narrow output).
    out = jnp.dot(h.astype(jnp.bfloat16), w_ref[3],
                  preferred_element_type=jnp.float32) + b_ref[3]
    o_ref[...] = out[:, :OUT_FEATURES]


# ----------------------------------------------------------------------------
# One-time parameter repacking (hoisted out of the per-call forward path).
# ----------------------------------------------------------------------------
def _pad2d(a, rows, cols):
    r, c = a.shape
    return jnp.pad(a, ((0, rows - r), (0, cols - c)))


def prep_params(params):
    """PyTorch-style params {name: (W [out,in], b [out])} -> stacked, padded arrays.

    Returns:
      w_stack: [4, 128, 128] bf16, each slice is W.T zero-padded (kernel computes x @ W).
      b_stack: [4, 1, 128]   f32, zero-padded biases.
    Invariant: padded weight rows/cols AND padded bias lanes are exactly zero.
    """
    Ws, bs = [], []
    for name in ("fc1", "fc2", "fc3", "fc4"):
        W, b = params[name]
        Ws.append(_pad2d(W.T.astype(jnp.float32), LANE, LANE))
        bs.append(_pad2d(b.astype(jnp.float32)[None, :], 1, LANE))
    return jnp.stack(Ws).astype(jnp.bfloat16), jnp.stack(bs)


# ----------------------------------------------------------------------------
# Forward wrapper: no padding, no slicing — a single pallas_call under jit.
# ----------------------------------------------------------------------------
def _round_up(n, m):
    return ((n + m - 1) // m) * m


def _choose_tile_b(B):
    if B <= SUB:
        return SUB
    # Aim for >=2 grid steps (v7x has 2 TensorCores) while keeping the MXU M-dim large.
    return min(BIG_TILE_B, _round_up(pl.cdiv(B, 2), SUB))


@jax.jit
def simple_mlp_forward(x, w_stack, b_stack):
    """x: [B, 3] f32.  w_stack: [4,128,128] bf16.  b_stack: [4,1,128] f32. -> [B, 3] f32."""
    B, F = x.shape
    assert F == IN_FEATURES
    tile_b = _choose_tile_b(B)

    return pl.pallas_call(
        mlp_kernel,
        out_shape=jax.ShapeDtypeStruct((B, OUT_FEATURES), jnp.float32),
        grid=(pl.cdiv(B, tile_b),),
        in_specs=[
            pl.BlockSpec((tile_b, IN_FEATURES), lambda i: (i, 0)),   # x: walk batch axis
            pl.BlockSpec((4, LANE, LANE), lambda i: (0, 0, 0)),      # weights: VMEM-resident
            pl.BlockSpec((4, 1, LANE), lambda i: (0, 0, 0)),         # biases:  VMEM-resident
        ],
        out_specs=pl.BlockSpec((tile_b, OUT_FEATURES), lambda i: (i, 0)),
        compiler_params=pltpu.CompilerParams(
            dimension_semantics=("parallel",)),
    )(x.astype(jnp.float32), w_stack, b_stack)


# ----------------------------------------------------------------------------
# Param init (matches nn.Linear default init shapes) + pure-JAX reference.
# ----------------------------------------------------------------------------
def init_params(key):
    dims = [("fc1", 3, 20), ("fc2", 20, 20), ("fc3", 20, 20), ("fc4", 20, 3)]
    params = {}
    for name, fan_in, fan_out in dims:
        key, kw, kb = jax.random.split(key, 3)
        bound = 1.0 / jnp.sqrt(fan_in)
        W = jax.random.uniform(kw, (fan_out, fan_in), jnp.float32, -bound, bound)
        b = jax.random.uniform(kb, (fan_out,), jnp.float32, -bound, bound)
        params[name] = (W, b)
    return params


def reference_forward(x, params):
    h = x
    for name in ("fc1", "fc2", "fc3"):
        W, b = params[name]
        h = jnp.maximum(h @ W.T + b, 0.0)
    W, b = params["fc4"]
    return h @ W.T + b


if __name__ == "__main__":
    root = jax.random.PRNGKey(0)
    kp, kx1, kx2 = jax.random.split(root, 3)

    params = init_params(kp)
    w_stack, b_stack = prep_params(params)          # one-time repack (not per-call)

    # Small-shape check: batch=2 of 3-d points (matches the assignment's forward).
    x_small = jax.random.normal(kx1, (2, IN_FEATURES), jnp.float32)
    out_small = jax.block_until_ready(simple_mlp_forward(x_small, w_stack, b_stack))
    ref_small = reference_forward(x_small, params)
    assert out_small.shape == (2, OUT_FEATURES)
    assert jnp.allclose(out_small, ref_small, atol=5e-2, rtol=5e-2), (out_small, ref_small)

    # Larger, non-multiple batch: exercises the cdiv grid + edge-block masking path.
    x_big = jax.random.normal(kx2, (1037, IN_FEATURES), jnp.float32)
    out_big = jax.block_until_ready(simple_mlp_forward(x_big, w_stack, b_stack))
    ref_big = reference_forward(x_big, params)
    assert out_big.shape == (1037, OUT_FEATURES)
    assert jnp.allclose(out_big, ref_big, atol=5e-2, rtol=5e-2)

    print("KERNEL_OK")
</pallas_src>

<mosaic_0001>
module attributes {stable_mosaic.version = 11 : i64} {
  func.func @mlp_kernel(%arg0: i32, %arg1: memref<8x3xf32, #tpu.memory_space<vmem>>, %arg2: memref<4x128x128xbf16, #tpu.memory_space<vmem>>, %arg3: memref<4x1x128xf32, #tpu.memory_space<vmem>>, %arg4: memref<8x3xf32, #tpu.memory_space<vmem>>) attributes {dimension_semantics = [#tpu.dimension_semantics<parallel>], iteration_bounds = array<i64: 1>, scalar_prefetch = 0 : i64, scratch_operands = 0 : i64, tpu.core_type = #tpu.core_type<tc>, window_params = [{transform_indices = @transform_0, window_bounds = array<i64: 8, 3>}, {pipeline_mode = #tpu.pipeline_mode<synchronous>, transform_indices = @transform_1, window_bounds = array<i64: 4, 128, 128>}, {pipeline_mode = #tpu.pipeline_mode<synchronous>, transform_indices = @transform_2, window_bounds = array<i64: 4, 1, 128>}, {transform_indices = @transform_3, window_bounds = array<i64: 8, 3>}]} {
    %c0 = arith.constant 0 : index
    %c0_0 = arith.constant 0 : index
    %0 = vector.load %arg1[%c0, %c0_0] : memref<8x3xf32, #tpu.memory_space<vmem>>, vector<8x3xf32>
    %c0_1 = arith.constant 0 : index
    %c0_2 = arith.constant 0 : index
    %c0_3 = arith.constant 0 : index
    %1 = vector.load %arg2[%c0_1, %c0_2, %c0_3] : memref<4x128x128xbf16, #tpu.memory_space<vmem>>, vector<1x3x128xbf16>
    %2 = vector.shape_cast %1 : vector<1x3x128xbf16> to vector<3x128xbf16>
    %3 = arith.extf %2 : vector<3x128xbf16> to vector<3x128xf32>
    %4 = vector.extract_strided_slice %0 {offsets = [0, 0], sizes = [8, 1], strides = [1, 1]} : vector<8x3xf32> to vector<8x1xf32>
    %5 = vector.extract_strided_slice %3 {offsets = [0, 0], sizes = [1, 128], strides = [1, 1]} : vector<3x128xf32> to vector<1x128xf32>
    %6 = vector.broadcast %4 : vector<8x1xf32> to vector<8x128xf32>
    %7 = vector.broadcast %5 : vector<1x128xf32> to vector<8x128xf32>
    %8 = arith.mulf %6, %7 : vector<8x128xf32>
    %9 = vector.extract_strided_slice %0 {offsets = [0, 1], sizes = [8, 1], strides = [1, 1]} : vector<8x3xf32> to vector<8x1xf32>
    %10 = vector.extract_strided_slice %3 {offsets = [1, 0], sizes = [1, 128], strides = [1, 1]} : vector<3x128xf32> to vector<1x128xf32>
    %11 = vector.broadcast %9 : vector<8x1xf32> to vector<8x128xf32>
    %12 = vector.broadcast %10 : vector<1x128xf32> to vector<8x128xf32>
    %13 = arith.mulf %11, %12 : vector<8x128xf32>
    %14 = arith.addf %8, %13 : vector<8x128xf32>
    %15 = vector.extract_strided_slice %0 {offsets = [0, 2], sizes = [8, 1], strides = [1, 1]} : vector<8x3xf32> to vector<8x1xf32>
    %16 = vector.extract_strided_slice %3 {offsets = [2, 0], sizes = [1, 128], strides = [1, 1]} : vector<3x128xf32> to vector<1x128xf32>
    %17 = vector.broadcast %15 : vector<8x1xf32> to vector<8x128xf32>
    %18 = vector.broadcast %16 : vector<1x128xf32> to vector<8x128xf32>
    %19 = arith.mulf %17, %18 : vector<8x128xf32>
    %20 = arith.addf %14, %19 : vector<8x128xf32>
    %c0_4 = arith.constant 0 : index
    %c0_5 = arith.constant 0 : index
    %c0_6 = arith.constant 0 : index
    %21 = vector.load %arg3[%c0_4, %c0_5, %c0_6] : memref<4x1x128xf32, #tpu.memory_space<vmem>>, vector<1x1x128xf32>
    %22 = vector.shape_cast %21 : vector<1x1x128xf32> to vector<1x128xf32>
    %23 = vector.broadcast %22 : vector<1x128xf32> to vector<8x128xf32>
    %24 = arith.addf %20, %23 : vector<8x128xf32>
    %cst = arith.constant 0.000000e+00 : f32
    %25 = vector.broadcast %cst : f32 to vector<8x128xf32>
    %26 = arith.maximumf %24, %25 : vector<8x128xf32>
    %27 = arith.truncf %26 : vector<8x128xf32> to vector<8x128xbf16>
    %c1 = arith.constant 1 : index
    %c0_7 = arith.constant 0 : index
    %c0_8 = arith.constant 0 : index
    %28 = vector.load %arg2[%c1, %c0_7, %c0_8] : memref<4x128x128xbf16, #tpu.memory_space<vmem>>, vector<1x128x128xbf16>
    %29 = vector.shape_cast %28 : vector<1x128x128xbf16> to vector<128x128xbf16>
    %cst_9 = arith.constant dense<0.000000e+00> : vector<8x128xf32>
    %30 = tpu.matmul %27, %29, %cst_9 {dimension_numbers = #tpu.dot_dimension_numbers<[1], [0], [0], [1], [0, 0, 1, 1], [], []>} : vector<8x128xbf16>, vector<128x128xbf16>, vector<8x128xf32> -> vector<8x128xf32>
    %c1_10 = arith.constant 1 : index
    %c0_11 = arith.constant 0 : index
    %c0_12 = arith.constant 0 : index
    %31 = vector.load %arg3[%c1_10, %c0_11, %c0_12] : memref<4x1x128xf32, #tpu.memory_space<vmem>>, vector<1x1x128xf32>
    %32 = vector.shape_cast %31 : vector<1x1x128xf32> to vector<1x128xf32>
    %33 = vector.broadcast %32 : vector<1x128xf32> to vector<8x128xf32>
    %34 = arith.addf %30, %33 : vector<8x128xf32>
    %cst_13 = arith.constant 0.000000e+00 : f32
    %35 = vector.broadcast %cst_13 : f32 to vector<8x128xf32>
    %36 = arith.maximumf %34, %35 : vector<8x128xf32>
    %37 = arith.truncf %36 : vector<8x128xf32> to vector<8x128xbf16>
    %c2 = arith.constant 2 : index
    %c0_14 = arith.constant 0 : index
    %c0_15 = arith.constant 0 : index
    %38 = vector.load %arg2[%c2, %c0_14, %c0_15] : memref<4x128x128xbf16, #tpu.memory_space<vmem>>, vector<1x128x128xbf16>
    %39 = vector.shape_cast %38 : vector<1x128x128xbf16> to vector<128x128xbf16>
    %cst_16 = arith.constant dense<0.000000e+00> : vector<8x128xf32>
    %40 = tpu.matmul %37, %39, %cst_16 {dimension_numbers = #tpu.dot_dimension_numbers<[1], [0], [0], [1], [0, 0, 1, 1], [], []>} : vector<8x128xbf16>, vector<128x128xbf16>, vector<8x128xf32> -> vector<8x128xf32>
    %c2_17 = arith.constant 2 : index
    %c0_18 = arith.constant 0 : index
    %c0_19 = arith.constant 0 : index
    %41 = vector.load %arg3[%c2_17, %c0_18, %c0_19] : memref<4x1x128xf32, #tpu.memory_space<vmem>>, vector<1x1x128xf32>
    %42 = vector.shape_cast %41 : vector<1x1x128xf32> to vector<1x128xf32>
    %43 = vector.broadcast %42 : vector<1x128xf32> to vector<8x128xf32>
    %44 = arith.addf %40, %43 : vector<8x128xf32>
    %cst_20 = arith.constant 0.000000e+00 : f32
    %45 = vector.broadcast %cst_20 : f32 to vector<8x128xf32>
    %46 = arith.maximumf %44, %45 : vector<8x128xf32>
    %47 = arith.truncf %46 : vector<8x128xf32> to vector<8x128xbf16>
    %c3 = arith.constant 3 : index
    %c0_21 = arith.constant 0 : index
    %c0_22 = arith.constant 0 : index
    %48 = vector.load %arg2[%c3, %c0_21, %c0_22] : memref<4x128x128xbf16, #tpu.memory_space<vmem>>, vector<1x128x128xbf16>
    %49 = vector.shape_cast %48 : vector<1x128x128xbf16> to vector<128x128xbf16>
    %cst_23 = arith.constant dense<0.000000e+00> : vector<8x128xf32>
    %50 = tpu.matmul %47, %49, %cst_23 {dimension_numbers = #tpu.dot_dimension_numbers<[1], [0], [0], [1], [0, 0, 1, 1], [], []>} : vector<8x128xbf16>, vector<128x128xbf16>, vector<8x128xf32> -> vector<8x128xf32>
    %c3_24 = arith.constant 3 : index
    %c0_25 = arith.constant 0 : index
    %c0_26 = arith.constant 0 : index
    %51 = vector.load %arg3[%c3_24, %c0_25, %c0_26] : memref<4x1x128xf32, #tpu.memory_space<vmem>>, vector<1x1x128xf32>
    %52 = vector.shape_cast %51 : vector<1x1x128xf32> to vector<1x128xf32>
    %53 = vector.broadcast %52 : vector<1x128xf32> to vector<8x128xf32>
    %54 = arith.addf %50, %53 : vector<8x128xf32>
    %55 = vector.extract_strided_slice %54 {offsets = [0, 0], sizes = [8, 3], strides = [1, 1]} : vector<8x128xf32> to vector<8x3xf32>
    %c0_27 = arith.constant 0 : index
    %c0_28 = arith.constant 0 : index
    %56 = vector.load %arg4[%c0_27, %c0_28] : memref<8x3xf32, #tpu.memory_space<vmem>>, vector<8x3xf32>
    tpu.vector_store %arg4[%c0_27, %c0_28], %55 {strides = array<i32>} : memref<8x3xf32, #tpu.memory_space<vmem>>, vector<8x3xf32>,
    return
  }
  func.func @transform_0(%arg0: i32) -> (i32, i32) {
    %c0_i32 = arith.constant 0 : i32
    %c0_i32_0 = arith.constant 0 : i32
    return %arg0, %c0_i32 : i32, i32
  }
  func.func @transform_1(%arg0: i32) -> (i32, i32, i32) {
    %c0_i32 = arith.constant 0 : i32
    %c0_i32_0 = arith.constant 0 : i32
    %c0_i32_1 = arith.constant 0 : i32
    %c0_i32_2 = arith.constant 0 : i32
    return %c0_i32, %c0_i32_0, %c0_i32_1 : i32, i32, i32
  }
  func.func @transform_2(%arg0: i32) -> (i32, i32, i32) {
    %c0_i32 = arith.constant 0 : i32
    %c0_i32_0 = arith.constant 0 : i32
    %c0_i32_1 = arith.constant 0 : i32
    %c0_i32_2 = arith.constant 0 : i32
    return %c0_i32, %c0_i32_0, %c0_i32_1 : i32, i32, i32
  }
  func.func @transform_3(%arg0: i32) -> (i32, i32) {
    %c0_i32 = arith.constant 0 : i32
    %c0_i32_0 = arith.constant 0 : i32
    return %arg0, %c0_i32 : i32, i32
  }
}

</mosaic_0001>

<llo_original>
// kernel: simple_mlp_forward.1
$region0: #{simple_mlp_forward.1}
  #allocation0 [shape = 'u32[]', space=smem, size = 0x4, offset = 0x4, fixed_abs, tag = 'smem constant byte address 0x4 - core index']
  #allocation1 [shape = 'u32[144,128]{1,0:T(1,128)}', space=vmem, size = 0x12000, scoped, tag = 'internal scratch']
  %s0 = inlined_call_operand.hbm [shape: f32[2,3], index: 0, kind: input, shape index: {}]
  %s1 = inlined_call_operand.hbm [shape: bf16[4,128,128], index: 1, kind: input, shape index: {}]
  %s2 = inlined_call_operand.hbm [shape: f32[4,1,128], index: 2, kind: input, shape index: {}]
  %s3 = inlined_call_operand.hbm [shape: f32[2,3], index: 3, kind: output, shape index: {}]
  %s4 = sld [smem:[#allocation0]]
  $region34: #{simple_mlp_forward.1} parent=0
    _
  %s6 = ssub.s32 1, %s4
  %s7 = scalar_select 0, %s6, %s4
  $region1: #{simple_mlp_forward.1} parent=0
    #allocation2 [shape = 'u8[4096]{0}', space=vmem, size = 0x1000, scoped, tag = 'input window, operand 0, single buffered']
    #allocation3 [shape = 's32[1]{0}', space=sflag, size = 0x4, scoped, tag = 'scoped memory for simple_mlp_forward.1']
    #allocation4 [shape = 's32[1]{0}', space=sflag, size = 0x4, scoped, tag = 'scoped memory for simple_mlp_forward.1']
    #allocation5 [shape = 'u8[131072]{0}', space=vmem, size = 0x20000, scoped, tag = 'input window, operand 1, single buffered']
    #allocation6 [shape = 's32[1]{0}', space=sflag, size = 0x4, scoped, tag = 'scoped memory for simple_mlp_forward.1']
    #allocation7 [shape = 'u8[2048]{0}', space=vmem, size = 0x800, scoped, tag = 'input window, operand 2, single buffered']
    #allocation8 [shape = 'u8[4096]{0}', space=vmem, size = 0x1000, scoped, tag = 'output window, operand 0, single buffered']
    %8 = vsyncpa [#allocation3], 0
    %9 = vsyncpa [#allocation6], 0
    %10 = vsyncpa [#allocation4], 0
    // Predicated region
    $region2: #{simple_mlp_forward.1} parent=1 // pred_check
      _
    $region3: #{simple_mlp_forward.1} parent=1 // pred_check_branch
      %12 = sbr.rel (0) target = $region5
    $region4: #{simple_mlp_forward.1} parent=1 // pred_region
      %s14 = ssub.s32 128, 32
      %15 = vsyncadd [#allocation3], %s14
      %s16 = sshll.u32 [#allocation2], 4
      %s17 = int_to_ptr.vmem [resolvable:$true] %s16
      %22 = dma.hbm_to_vmem [thread:$0]  %s0, 32, %s17, [#allocation3], 32, 32, 2
    $region5: #{simple_mlp_forward.1} parent=1 // pred_fallthru
      _
    // Predicated region
    $region6: #{simple_mlp_forward.1} parent=1 // pred_check
      _
    $region7: #{simple_mlp_forward.1} parent=1 // pred_check_branch
      %24 = sbr.rel (0) target = $region9
    $region8: #{simple_mlp_forward.1} parent=1 // pred_region
      %s26 = ssub.s32 4096, 4096
      %27 = vsyncadd [#allocation6], %s26
      %s28 = sshll.u32 [#allocation5], 4
      %s29 = int_to_ptr.vmem [resolvable:$true] %s28
      %34 = dma.hbm_to_vmem [thread:$0]  %s1, 4096, %s29, [#allocation6], 64, 64, 4
    $region9: #{simple_mlp_forward.1} parent=1 // pred_fallthru
      _
    // Predicated region
    $region10: #{simple_mlp_forward.1} parent=1 // pred_check
      _
    $region11: #{simple_mlp_forward.1} parent=1 // pred_check_branch
      %36 = sbr.rel (0) target = $region13
    $region12: #{simple_mlp_forward.1} parent=1 // pred_region
      %s38 = ssub.s32 64, 64
      %39 = vsyncadd [#allocation6], %s38
      %s40 = sshll.u32 [#allocation7], 4
      %s41 = int_to_ptr.vmem [resolvable:$true] %s40
      %46 = dma.hbm_to_vmem [thread:$0]  %s2, 64, %s41, [#allocation6], 16, 16, 1
    $region13: #{simple_mlp_forward.1} parent=1 // pred_fallthru
      _
    // Predicated region
    $region14: #{simple_mlp_forward.1} parent=1 // pred_check
      _
    $region15: #{simple_mlp_forward.1} parent=1 // pred_check_branch
      %48 = sbr.rel (0) target = $region17
    $region16: #{simple_mlp_forward.1} parent=1 // pred_region
      %49 = dma.done [#allocation3], 128
    $region17: #{simple_mlp_forward.1} parent=1 // pred_fallthru
      _
    // Predicated region
    $region18: #{simple_mlp_forward.1} parent=1 // pred_check
      _
    $region19: #{simple_mlp_forward.1} parent=1 // pred_check_branch
      %51 = sbr.rel (0) target = $region21
    $region20: #{simple_mlp_forward.1} parent=1 // pred_region
      %52 = dma.done [#allocation6], 4096
    $region21: #{simple_mlp_forward.1} parent=1 // pred_fallthru
      _
    // Predicated region
    $region22: #{simple_mlp_forward.1} parent=1 // pred_check
      _
    $region23: #{simple_mlp_forward.1} parent=1 // pred_check_branch
      %54 = sbr.rel (0) target = $region25
    $region24: #{simple_mlp_forward.1} parent=1 // pred_region
      %55 = dma.done [#allocation6], 64
    $region25: #{simple_mlp_forward.1} parent=1 // pred_fallthru
      _
    %v57 = vld [vmem:[#allocation2] sm:$0xff]
    %v58 = vld [vmem:[#allocation5] sm:$0x3]
    %v59 = vunpack.c.l.bf16 %v58
    %61 = vset.pattern.permute.xlu0 0
    %62 = vperm.xlu0 %61, %v57
    %v63 = vpop.permute.xlu0 %62
    %v65 = vlaneseq
    %v66 = vshrl.u32 %v65, 7
    %v67 = vsub.s32 0, %v66
    %v68 = vrot.slane %v59, %v67
    %v69 = vmul.f32 %v63, %v68
    %70 = vset.pattern.permute.xlu0 1
    %71 = vperm.xlu0 %70, %v57
    %v72 = vpop.permute.xlu0 %71
    %v74 = vlaneseq
    %v75 = vshrl.u32 %v74, 7
    %v76 = vsub.s32 1, %v75
    %v77 = vrot.slane %v59, %v76
    %v78 = vmul.f32 %v72, %v77
    %v79 = vadd.f32 %v69, %v78
    %80 = vset.pattern.permute.xlu0 2
    %81 = vperm.xlu0 %80, %v57
    %v82 = vpop.permute.xlu0 %81
    %v84 = vlaneseq
    %v85 = vshrl.u32 %v84, 7
    %v86 = vsub.s32 2, %v85
    %v87 = vrot.slane %v59, %v86
    %v88 = vmul.f32 %v82, %v87
    %v89 = vadd.f32 %v79, %v88
    %v90 = vld [vmem:[#allocation7] sm:$0x1]
    %v92 = vlaneseq
    %v93 = vshrl.u32 %v92, 7
    %v94 = vsub.s32 0, %v93
    %v95 = vrot.slane %v90, %v94
    %v97 = vadd.f32 %v89, %v95
    %v98 = vmax.f32 %v97, 0.0
    %v99 = vpack.c.bf16 %v98, %v98
    %s100 = scalar_lea.vmem [#allocation5], 64
    %v101 = vld [vmem:[%s100] sm:$0xf]
    %v102 = vld [vmem:[%s100 + $0x4] sm:$0xf]
    %v103 = vld [vmem:[%s100 + $0x8] sm:$0xf]
    %v104 = vld [vmem:[%s100 + $0xc] sm:$0xf]
    %v105 = vld [vmem:[%s100 + $0x10] sm:$0xf]
    %v106 = vld [vmem:[%s100 + $0x14] sm:$0xf]
    %v107 = vld [vmem:[%s100 + $0x18] sm:$0xf]
    %v108 = vld [vmem:[%s100 + $0x1c] sm:$0xf]
    %v109 = vld [vmem:[%s100 + $0x20] sm:$0xf]
    %v110 = vld [vmem:[%s100 + $0x24] sm:$0xf]
    %v111 = vld [vmem:[%s100 + $0x28] sm:$0xf]
    %v112 = vld [vmem:[%s100 + $0x2c] sm:$0xf]
    %v113 = vld [vmem:[%s100 + $0x30] sm:$0xf]
    %v114 = vld [vmem:[%s100 + $0x34] sm:$0xf]
    %v115 = vld [vmem:[%s100 + $0x38] sm:$0xf]
    %v116 = vld [vmem:[%s100 + $0x3c] sm:$0xf]
    %s117 = scalar_lea.vmem [#allocation7], 1
    %v118 = vld [vmem:[%s117] sm:$0x1]
    %v120 = vlaneseq
    %v121 = vshrl.u32 %v120, 7
    %v122 = vsub.s32 0, %v121
    %v123 = vrot.slane %v118, %v122
    %v141 = vunpack.c.l.b16 %v101
    %v142 = vunpack.c.l.b16 %v102
    %v143 = vunpack.c.l.b16 %v103
    %v144 = vunpack.c.l.b16 %v104
    %v145 = vunpack.c.l.b16 %v105
    %v146 = vunpack.c.l.b16 %v106
    %v147 = vunpack.c.l.b16 %v107
    %v148 = vunpack.c.l.b16 %v108
    %v149 = vunpack.c.l.b16 %v109
    %v150 = vunpack.c.l.b16 %v110
    %v151 = vunpack.c.l.b16 %v111
    %v152 = vunpack.c.l.b16 %v112
    %v153 = vunpack.c.l.b16 %v113
    %v154 = vunpack.c.l.b16 %v114
    %v155 = vunpack.c.l.b16 %v115
    %v156 = vunpack.c.l.b16 %v116
    %v157 = vpack.c.b16 %v142, %v141
    %v158 = vpack.c.b16 %v144, %v143
    %v159 = vpack.c.b16 %v146, %v145
    %v160 = vpack.c.b16 %v148, %v147
    %v161 = vpack.c.b16 %v150, %v149
    %v162 = vpack.c.b16 %v152, %v151
    %v163 = vpack.c.b16 %v154, %v153
    %v164 = vpack.c.b16 %v156, %v155
    %173 = vmatprep.subr.bf16.mxu0 0
    %174 = vmatpush1.bf16.msra.mxu0 %v164
    %175 = vmatprep.subr.bf16.mxu0 0
    %176 = vmatpush1.bf16.msra.mxu0 %v163
    %177 = vmatprep.subr.bf16.mxu0 0
    %178 = vmatpush1.bf16.msra.mxu0 %v162
    %179 = vmatprep.subr.bf16.mxu0 0
    %180 = vmatpush1.bf16.msra.mxu0 %v161
    %181 = vmatprep.subr.bf16.mxu0 0
    %182 = vmatpush1.bf16.msra.mxu0 %v160
    %183 = vmatprep.subr.bf16.mxu0 0
    %184 = vmatpush1.bf16.msra.mxu0 %v159
    %185 = vmatprep.subr.bf16.mxu0 0
    %186 = vmatpush1.bf16.msra.mxu0 %v158
    %187 = vmatprep.subr.bf16.mxu0 0
    %188 = vmatpush1.bf16.msra.mxu0 %v157
    %189 = vmatprep.subr.bf16.mxu0 0
    %190 = vmatpush2.bf16.msra.mxu0 0
    %191 = vmatprep.subr.bf16.mxu0 0
    %192 = vmatpush2.bf16.msra.mxu0 0
    %193 = vmatprep.subr.bf16.mxu0 0
    %194 = vmatpush2.bf16.msra.mxu0 0
    %195 = vmatprep.subr.bf16.mxu0 0
    %196 = vmatpush2.bf16.msra.mxu0 0
    %197 = vmatprep.subr.bf16.mxu0 0
    %198 = vmatpush2.bf16.msra.mxu0 0
    %199 = vmatprep.subr.bf16.mxu0 0
    %200 = vmatpush2.bf16.msra.mxu0 0
    %201 = vmatprep.subr.bf16.mxu0 0
    %202 = vmatpush2.bf16.msra.mxu0 0
    %203 = vmatprep.subr.bf16.mxu0 0
    %204 = vmatpush2.bf16.msra.mxu0 0
    %205 = vmatprep.mubr.bf16.mxu0 0
    %206 = vmatmul.mubr.bf16.gmra.mxu0 %v99
    %v207 = vpop.f32.mrf.mxu0
    %v208 = vadd.f32 %v123, %v207
    %v209 = vpop.f32.mrf.mxu0
    %v210 = vpop.f32.mrf.mxu0
    %v211 = vpop.f32.mrf.mxu0
    %212 = vdwg.mxu0
    %v213 = vmax.f32 %v208, 0.0
    %v214 = vpack.c.bf16 %v213, %v213
    %s215 = scalar_lea.vmem [#allocation5], 128
    %v216 = vld [vmem:[%s215] sm:$0xf]
    %v217 = vld [vmem:[%s215 + $0x4] sm:$0xf]
    %v218 = vld [vmem:[%s215 + $0x8] sm:$0xf]
    %v219 = vld [vmem:[%s215 + $0xc] sm:$0xf]
    %v220 = vld [vmem:[%s215 + $0x10] sm:$0xf]
    %v221 = vld [vmem:[%s215 + $0x14] sm:$0xf]
    %v222 = vld [vmem:[%s215 + $0x18] sm:$0xf]
    %v223 = vld [vmem:[%s215 + $0x1c] sm:$0xf]
    %v224 = vld [vmem:[%s215 + $0x20] sm:$0xf]
    %v225 = vld [vmem:[%s215 + $0x24] sm:$0xf]
    %v226 = vld [vmem:[%s215 + $0x28] sm:$0xf]
    %v227 = vld [vmem:[%s215 + $0x2c] sm:$0xf]
    %v228 = vld [vmem:[%s215 + $0x30] sm:$0xf]
    %v229 = vld [vmem:[%s215 + $0x34] sm:$0xf]
    %v230 = vld [vmem:[%s215 + $0x38] sm:$0xf]
    %v231 = vld [vmem:[%s215 + $0x3c] sm:$0xf]
    %s232 = scalar_lea.vmem [#allocation7], 2
    %v233 = vld [vmem:[%s232] sm:$0x1]
    %v235 = vlaneseq
    %v236 = vshrl.u32 %v235, 7
    %v237 = vsub.s32 0, %v236
    %v238 = vrot.slane %v233, %v237
    %v256 = vunpack.c.l.b16 %v216
    %v257 = vunpack.c.l.b16 %v217
    %v258 = vunpack.c.l.b16 %v218
    %v259 = vunpack.c.l.b16 %v219
    %v260 = vunpack.c.l.b16 %v220
    %v261 = vunpack.c.l.b16 %v221
    %v262 = vunpack.c.l.b16 %v222
    %v263 = vunpack.c.l.b16 %v223
    %v264 = vunpack.c.l.b16 %v224
    %v265 = vunpack.c.l.b16 %v225
    %v266 = vunpack.c.l.b16 %v226
    %v267 = vunpack.c.l.b16 %v227
    %v268 = vunpack.c.l.b16 %v228
    %v269 = vunpack.c.l.b16 %v229
    %v270 = vunpack.c.l.b16 %v230
    %v271 = vunpack.c.l.b16 %v231
    %v272 = vpack.c.b16 %v257, %v256
    %v273 = vpack.c.b16 %v259, %v258
    %v274 = vpack.c.b16 %v261, %v260
    %v275 = vpack.c.b16 %v263, %v262
    %v276 = vpack.c.b16 %v265, %v264
    %v277 = vpack.c.b16 %v267, %v266
    %v278 = vpack.c.b16 %v269, %v268
    %v279 = vpack.c.b16 %v271, %v270
    %288 = vmatprep.subr.bf16.mxu0 0
    %289 = vmatpush1.bf16.msra.mxu0 %v279
    %290 = vmatprep.subr.bf16.mxu0 0
    %291 = vmatpush1.bf16.msra.mxu0 %v278
    %292 = vmatprep.subr.bf16.mxu0 0
    %293 = vmatpush1.bf16.msra.mxu0 %v277
    %294 = vmatprep.subr.bf16.mxu0 0
    %295 = vmatpush1.bf16.msra.mxu0 %v276
    %296 = vmatprep.subr.bf16.mxu0 0
    %297 = vmatpush1.bf16.msra.mxu0 %v275
    %298 = vmatprep.subr.bf16.mxu0 0
    %299 = vmatpush1.bf16.msra.mxu0 %v274
    %300 = vmatprep.subr.bf16.mxu0 0
    %301 = vmatpush1.bf16.msra.mxu0 %v273
    %302 = vmatprep.subr.bf16.mxu0 0
    %303 = vmatpush1.bf16.msra.mxu0 %v272
    %304 = vmatprep.subr.bf16.mxu0 0
    %305 = vmatpush2.bf16.msra.mxu0 0
    %306 = vmatprep.subr.bf16.mxu0 0
    %307 = vmatpush2.bf16.msra.mxu0 0
    %308 = vmatprep.subr.bf16.mxu0 0
    %309 = vmatpush2.bf16.msra.mxu0 0
    %310 = vmatprep.subr.bf16.mxu0 0
    %311 = vmatpush2.bf16.msra.mxu0 0
    %312 = vmatprep.subr.bf16.mxu0 0
    %313 = vmatpush2.bf16.msra.mxu0 0
    %314 = vmatprep.subr.bf16.mxu0 0
    %315 = vmatpush2.bf16.msra.mxu0 0
    %316 = vmatprep.subr.bf16.mxu0 0
    %317 = vmatpush2.bf16.msra.mxu0 0
    %318 = vmatprep.subr.bf16.mxu0 0
    %319 = vmatpush2.bf16.msra.mxu0 0
    %320 = vmatprep.mubr.bf16.mxu0 0
    %321 = vmatmul.mubr.bf16.gmra.mxu0 %v214
    %v322 = vpop.f32.mrf.mxu0
    %v323 = vadd.f32 %v238, %v322
    %v324 = vpop.f32.mrf.mxu0
    %v325 = vpop.f32.mrf.mxu0
    %v326 = vpop.f32.mrf.mxu0
    %327 = vdwg.mxu0
    %v328 = vmax.f32 %v323, 0.0
    %v329 = vpack.c.bf16 %v328, %v328
    %s330 = scalar_lea.vmem [#allocation5], 192
    %v331 = vld [vmem:[%s330] sm:$0xf]
    %v332 = vld [vmem:[%s330 + $0x4] sm:$0xf]
    %v333 = vld [vmem:[%s330 + $0x8] sm:$0xf]
    %v334 = vld [vmem:[%s330 + $0xc] sm:$0xf]
    %v335 = vld [vmem:[%s330 + $0x10] sm:$0xf]
    %v336 = vld [vmem:[%s330 + $0x14] sm:$0xf]
    %v337 = vld [vmem:[%s330 + $0x18] sm:$0xf]
    %v338 = vld [vmem:[%s330 + $0x1c] sm:$0xf]
    %v339 = vld [vmem:[%s330 + $0x20] sm:$0xf]
    %v340 = vld [vmem:[%s330 + $0x24] sm:$0xf]
    %v341 = vld [vmem:[%s330 + $0x28] sm:$0xf]
    %v342 = vld [vmem:[%s330 + $0x2c] sm:$0xf]
    %v343 = vld [vmem:[%s330 + $0x30] sm:$0xf]
    %v344 = vld [vmem:[%s330 + $0x34] sm:$0xf]
    %v345 = vld [vmem:[%s330 + $0x38] sm:$0xf]
    %v346 = vld [vmem:[%s330 + $0x3c] sm:$0xf]
    %s347 = scalar_lea.vmem [#allocation7], 3
    %v348 = vld [vmem:[%s347] sm:$0x1]
    %v350 = vlaneseq
    %v351 = vshrl.u32 %v350, 7
    %v352 = vsub.s32 0, %v351
    %v353 = vrot.slane %v348, %v352
    %v371 = vunpack.c.l.b16 %v331
    %v372 = vunpack.c.l.b16 %v332
    %v373 = vunpack.c.l.b16 %v333
    %v374 = vunpack.c.l.b16 %v334
    %v375 = vunpack.c.l.b16 %v335
    %v376 = vunpack.c.l.b16 %v336
    %v377 = vunpack.c.l.b16 %v337
    %v378 = vunpack.c.l.b16 %v338
    %v379 = vunpack.c.l.b16 %v339
    %v380 = vunpack.c.l.b16 %v340
    %v381 = vunpack.c.l.b16 %v341
    %v382 = vunpack.c.l.b16 %v342
    %v383 = vunpack.c.l.b16 %v343
    %v384 = vunpack.c.l.b16 %v344
    %v385 = vunpack.c.l.b16 %v345
    %v386 = vunpack.c.l.b16 %v346
    %v387 = vpack.c.b16 %v372, %v371
    %v388 = vpack.c.b16 %v374, %v373
    %v389 = vpack.c.b16 %v376, %v375
    %v390 = vpack.c.b16 %v378, %v377
    %v391 = vpack.c.b16 %v380, %v379
    %v392 = vpack.c.b16 %v382, %v381
    %v393 = vpack.c.b16 %v384, %v383
    %v394 = vpack.c.b16 %v386, %v385
    %403 = vmatprep.subr.bf16.mxu0 0
    %404 = vmatpush1.bf16.msra.mxu0 %v394
    %405 = vmatprep.subr.bf16.mxu0 0
    %406 = vmatpush1.bf16.msra.mxu0 %v393
    %407 = vmatprep.subr.bf16.mxu0 0
    %408 = vmatpush1.bf16.msra.mxu0 %v392
    %409 = vmatprep.subr.bf16.mxu0 0
    %410 = vmatpush1.bf16.msra.mxu0 %v391
    %411 = vmatprep.subr.bf16.mxu0 0
    %412 = vmatpush1.bf16.msra.mxu0 %v390
    %413 = vmatprep.subr.bf16.mxu0 0
    %414 = vmatpush1.bf16.msra.mxu0 %v389
    %415 = vmatprep.subr.bf16.mxu0 0
    %416 = vmatpush1.bf16.msra.mxu0 %v388
    %417 = vmatprep.subr.bf16.mxu0 0
    %418 = vmatpush1.bf16.msra.mxu0 %v387
    %419 = vmatprep.subr.bf16.mxu0 0
    %420 = vmatpush2.bf16.msra.mxu0 0
    %421 = vmatprep.subr.bf16.mxu0 0
    %422 = vmatpush2.bf16.msra.mxu0 0
    %423 = vmatprep.subr.bf16.mxu0 0
    %424 = vmatpush2.bf16.msra.mxu0 0
    %425 = vmatprep.subr.bf16.mxu0 0
    %426 = vmatpush2.bf16.msra.mxu0 0
    %427 = vmatprep.subr.bf16.mxu0 0
    %428 = vmatpush2.bf16.msra.mxu0 0
    %429 = vmatprep.subr.bf16.mxu0 0
    %430 = vmatpush2.bf16.msra.mxu0 0
    %431 = vmatprep.subr.bf16.mxu0 0
    %432 = vmatpush2.bf16.msra.mxu0 0
    %433 = vmatprep.subr.bf16.mxu0 0
    %434 = vmatpush2.bf16.msra.mxu0 0
    %435 = vmatprep.mubr.bf16.mxu0 0
    %436 = vmatmul.mubr.bf16.gmra.mxu0 %v329
    %v437 = vpop.f32.mrf.mxu0
    %v438 = vadd.f32 %v353, %v437
    %v439 = vpop.f32.mrf.mxu0
    %v440 = vpop.f32.mrf.mxu0
    %v441 = vpop.f32.mrf.mxu0
    %442 = vdwg.mxu0
    %vm443 = vcmask 23552
    %444 = vst.msk [vmem:[#allocation8] sm:$0xff] %vm443, %v438
    // Predicated region
    $region26: #{simple_mlp_forward.1} parent=1 // pred_check
      _
    $region27: #{simple_mlp_forward.1} parent=1 // pred_check_branch
      %446 = sbr.rel (0) target = $region29
    $region28: #{simple_mlp_forward.1} parent=1 // pred_region
      %s448 = ssub.s32 128, 32
      %449 = vsyncadd [#allocation4], %s448
      %s450 = sshll.u32 [#allocation8], 4
      %s451 = int_to_ptr.vmem [resolvable:$true] %s450
      %456 = dma.vmem_to_hbm [thread:$0]  %s451, 32, %s3, [#allocation4], 32, 32, 2
    $region29: #{simple_mlp_forward.1} parent=1 // pred_fallthru
      _
    // Predicated region
    $region30: #{simple_mlp_forward.1} parent=1 // pred_check
      _
    $region31: #{simple_mlp_forward.1} parent=1 // pred_check_branch
      %458 = sbr.rel (0) target = $region33
    $region32: #{simple_mlp_forward.1} parent=1 // pred_region
      %459 = dma.done [#allocation4], 128
    $region33: #{simple_mlp_forward.1} parent=1 // pred_fallthru
      _
    %460 = vsyncpa [#allocation3], 1
    %461 = vsyncpa [#allocation6], 1
    %462 = vsyncpa [#allocation4], 1

</llo_original>
